<compile_context>
chip_gen: v7x
topology: tpu7x:2x2x1
jax: 0.10.0
libtpu: 0.0.40
codegen_flags: <defaults>
</compile_context>

<pallas_src>
import functools

import jax
import jax.numpy as jnp
from jax.experimental import pallas as pl
from jax.experimental.pallas import tpu as pltpu


def sescale_kernel(x_ref, w1_ref, b1_ref, w2_ref, b2_ref, o_ref, *,
                   compute_dtype):
    # In-kernel cast of the streamed x tile (no wrapper-side astype pass).
    x = x_ref[...].astype(compute_dtype)
    # fc1 + ReLU (f32 accumulation on the MXU).
    h = jnp.dot(x, w1_ref[...], preferred_element_type=jnp.float32)
    h = jnp.maximum(h + b1_ref[...], 0.0)                        # (TB, Rp) f32
    # fc2 + sigmoid.
    y = jnp.dot(h.astype(w2_ref.dtype), w2_ref[...],
                preferred_element_type=jnp.float32)
    y = y + b2_ref[...]                                          # (TB, C) f32
    o_ref[...] = jax.nn.sigmoid(y).astype(o_ref.dtype)


def _round_up(n, m):
    return ((n + m - 1) // m) * m


def _pad2d(a, rows, cols):
    pr, pc = rows - a.shape[0], cols - a.shape[1]
    if pr or pc:
        a = jnp.pad(a, ((0, pr), (0, pc)))
    return a


def se_scale(x, w1, b1, w2, b2, *, tile_b=None, compute_dtype=jnp.float32):
    """SEScale forward.

    x: (B, C); w1: (C, R); b1: (1, R) or (R,); w2: (R, C); b2: (1, C) or (C,).
    (w1/w2 are the PyTorch fc weights pre-transposed for row-major matmuls.)
    compute_dtype: dtype of the MXU operands (use jnp.bfloat16 on v6e/v7x);
    x is cast inside the kernel, accumulation and elementwise math stay f32.
    """
    B, C = x.shape
    R = w1.shape[1]
    out_dtype = x.dtype

    LANE, SUB = 128, 8
    R_pad = _round_up(max(R, LANE), LANE)

    b1 = jnp.reshape(b1, (1, R))
    b2 = jnp.reshape(b2, (1, C))

    # --- batch tile selection -------------------------------------------
    if tile_b is None:
        tile_b = 2048
        # Keep >=2 grid steps on large batches so the "parallel" batch axis
        # can shard across the two TensorCores of a v7x megacore.
        if 2 * SUB <= B <= 2 * tile_b:
            tile_b = pl.cdiv(B, 2)
    tile_b = int(tile_b)
    # Cap so streamed x/out double-buffers stay ~<=8 MiB (v5e scoped-VMEM
    # default is 16 MiB).  Weights are tiny and resident.
    row_bytes = 2 * 2 * C * jnp.dtype(x.dtype).itemsize   # x + out, 2 buffers
    vmem_rows = max(SUB, (8 * 1024 * 1024 // row_bytes) // SUB * SUB)
    tile_b = min(tile_b, vmem_rows)
    tile_b = max(SUB, min(_round_up(tile_b, SUB), _round_up(B, SUB)))
    grid = (pl.cdiv(B, tile_b),)

    # --- weights/biases: tiny, padded to a lane-dense hidden dim, resident --
    # Zero padding is semantics-preserving: padded h columns are relu(0)=0 and
    # padded W2 rows are zero.
    w1_p = _pad2d(w1, C, R_pad).astype(compute_dtype)
    b1_p = _pad2d(b1.astype(jnp.float32), 1, R_pad)
    w2_p = _pad2d(w2, R_pad, C).astype(compute_dtype)
    b2_p = b2.astype(jnp.float32)

    kernel = functools.partial(sescale_kernel, compute_dtype=compute_dtype)

    return pl.pallas_call(
        kernel,
        out_shape=jax.ShapeDtypeStruct((B, C), out_dtype),
        grid_spec=pltpu.PrefetchScalarGridSpec(
            num_scalar_prefetch=0,
            grid=grid,
            in_specs=[
                pl.BlockSpec((tile_b, C), lambda i: (i, 0)),   # x tile
                pl.BlockSpec((C, R_pad), lambda i: (0, 0)),    # W1 (resident)
                pl.BlockSpec((1, R_pad), lambda i: (0, 0)),    # b1
                pl.BlockSpec((R_pad, C), lambda i: (0, 0)),    # W2 (resident)
                pl.BlockSpec((1, C), lambda i: (0, 0)),        # b2
            ],
            out_specs=pl.BlockSpec((tile_b, C), lambda i: (i, 0)),
        ),
        compiler_params=pltpu.CompilerParams(
            dimension_semantics=("parallel",)),
    )(x, w1_p, b1_p, w2_p, b2_p)


def se_scale_ref(x, w1, b1, w2, b2):
    h = jnp.maximum(x @ w1 + b1, 0.0)
    return jax.nn.sigmoid(h @ w2 + b2)


if __name__ == "__main__":
    # Shapes consistent with the module defaults: in_channels=64, reduction=16.
    B, C, R = 8, 64, 16

    key = jax.random.PRNGKey(0)
    kx, k1, kb1, k2, kb2, kx2 = jax.random.split(key, 6)

    x = jax.random.normal(kx, (B, C), dtype=jnp.float32)
    w1 = jax.random.normal(k1, (C, R), dtype=jnp.float32) * (1.0 / C) ** 0.5
    b1 = jax.random.normal(kb1, (1, R), dtype=jnp.float32) * 0.1
    w2 = jax.random.normal(k2, (R, C), dtype=jnp.float32) * (1.0 / R) ** 0.5
    b2 = jax.random.normal(kb2, (1, C), dtype=jnp.float32) * 0.1

    ref = se_scale_ref(x, w1, b1, w2, b2)

    # 1) f32 path, small batch (single grid step) -- tight tolerance.
    out = jax.block_until_ready(se_scale(x, w1, b1, w2, b2))
    assert out.shape == (B, C)
    assert jnp.allclose(out, ref, atol=1e-5, rtol=1e-5), "f32 mismatch vs reference"

    # 2) bf16 MXU operands (in-kernel cast), multi-step pipelined grid with a
    #    ragged last batch block (B2 not a multiple of tile_b) -- loose tol.
    B2 = 1000
    x2 = jax.random.normal(kx2, (B2, C), dtype=jnp.float32)
    ref2 = se_scale_ref(x2, w1, b1, w2, b2)
    out2 = jax.block_until_ready(
        se_scale(x2, w1, b1, w2, b2, tile_b=256, compute_dtype=jnp.bfloat16))
    assert out2.shape == (B2, C)
    assert jnp.allclose(out2, ref2, atol=3e-2, rtol=3e-2), "bf16 mismatch vs reference"

    print("KERNEL_OK")
</pallas_src>

<mosaic_0001>
module attributes {stable_mosaic.version = 11 : i64} {
  func.func @sescale_kernel(%arg0: i32, %arg1: memref<8x64xf32, #tpu.memory_space<vmem>>, %arg2: memref<64x128xf32, #tpu.memory_space<vmem>>, %arg3: memref<1x128xf32, #tpu.memory_space<vmem>>, %arg4: memref<128x64xf32, #tpu.memory_space<vmem>>, %arg5: memref<1x64xf32, #tpu.memory_space<vmem>>, %arg6: memref<8x64xf32, #tpu.memory_space<vmem>>) attributes {dimension_semantics = [#tpu.dimension_semantics<parallel>], iteration_bounds = array<i64: 1>, scalar_prefetch = 0 : i64, scratch_operands = 0 : i64, tpu.core_type = #tpu.core_type<tc>, window_params = [{transform_indices = @transform_0, window_bounds = array<i64: 8, 64>}, {pipeline_mode = #tpu.pipeline_mode<synchronous>, transform_indices = @transform_1, window_bounds = array<i64: 64, 128>}, {pipeline_mode = #tpu.pipeline_mode<synchronous>, transform_indices = @transform_2, window_bounds = array<i64: 1, 128>}, {pipeline_mode = #tpu.pipeline_mode<synchronous>, transform_indices = @transform_3, window_bounds = array<i64: 128, 64>}, {pipeline_mode = #tpu.pipeline_mode<synchronous>, transform_indices = @transform_4, window_bounds = array<i64: 1, 64>}, {transform_indices = @transform_5, window_bounds = array<i64: 8, 64>}]} {
    %c0 = arith.constant 0 : index
    %c0_0 = arith.constant 0 : index
    %0 = vector.load %arg1[%c0, %c0_0] : memref<8x64xf32, #tpu.memory_space<vmem>>, vector<8x64xf32>
    %c0_1 = arith.constant 0 : index
    %c0_2 = arith.constant 0 : index
    %1 = vector.load %arg2[%c0_1, %c0_2] : memref<64x128xf32, #tpu.memory_space<vmem>>, vector<64x128xf32>
    %cst = arith.constant dense<0.000000e+00> : vector<8x128xf32>
    %2 = tpu.matmul %0, %1, %cst {dimension_numbers = #tpu.dot_dimension_numbers<[1], [0], [0], [1], [0, 0, 1, 1], [], []>} : vector<8x64xf32>, vector<64x128xf32>, vector<8x128xf32> -> vector<8x128xf32>
    %c0_3 = arith.constant 0 : index
    %c0_4 = arith.constant 0 : index
    %3 = vector.load %arg3[%c0_3, %c0_4] : memref<1x128xf32, #tpu.memory_space<vmem>>, vector<1x128xf32>
    %4 = vector.broadcast %3 : vector<1x128xf32> to vector<8x128xf32>
    %5 = arith.addf %2, %4 : vector<8x128xf32>
    %cst_5 = arith.constant 0.000000e+00 : f32
    %6 = vector.broadcast %cst_5 : f32 to vector<8x128xf32>
    %7 = arith.maximumf %5, %6 : vector<8x128xf32>
    %c0_6 = arith.constant 0 : index
    %c0_7 = arith.constant 0 : index
    %8 = vector.load %arg4[%c0_6, %c0_7] : memref<128x64xf32, #tpu.memory_space<vmem>>, vector<128x64xf32>
    %cst_8 = arith.constant dense<0.000000e+00> : vector<8x64xf32>
    %9 = tpu.matmul %7, %8, %cst_8 {dimension_numbers = #tpu.dot_dimension_numbers<[1], [0], [0], [1], [0, 0, 1, 1], [], []>} : vector<8x128xf32>, vector<128x64xf32>, vector<8x64xf32> -> vector<8x64xf32>
    %c0_9 = arith.constant 0 : index
    %c0_10 = arith.constant 0 : index
    %10 = vector.load %arg5[%c0_9, %c0_10] : memref<1x64xf32, #tpu.memory_space<vmem>>, vector<1x64xf32>
    %11 = vector.broadcast %10 : vector<1x64xf32> to vector<8x64xf32>
    %12 = arith.addf %9, %11 : vector<8x64xf32>
    %13 = arith.negf %12 : vector<8x64xf32>
    %14 = math.exp %13 : vector<8x64xf32>
    %cst_11 = arith.constant 1.000000e+00 : f32
    %15 = vector.broadcast %cst_11 : f32 to vector<8x64xf32>
    %16 = arith.addf %15, %14 : vector<8x64xf32>
    %17 = arith.divf %15, %16 : vector<8x64xf32>
    %c0_12 = arith.constant 0 : index
    %c0_13 = arith.constant 0 : index
    %18 = vector.load %arg6[%c0_12, %c0_13] : memref<8x64xf32, #tpu.memory_space<vmem>>, vector<8x64xf32>
    tpu.vector_store %arg6[%c0_12, %c0_13], %17 {strides = array<i32>} : memref<8x64xf32, #tpu.memory_space<vmem>>, vector<8x64xf32>,
    return
  }
  func.func @transform_0(%arg0: i32) -> (i32, i32) {
    %c0_i32 = arith.constant 0 : i32
    %c0_i32_0 = arith.constant 0 : i32
    return %arg0, %c0_i32 : i32, i32
  }
  func.func @transform_1(%arg0: i32) -> (i32, i32) {
    %c0_i32 = arith.constant 0 : i32
    %c0_i32_0 = arith.constant 0 : i32
    %c0_i32_1 = arith.constant 0 : i32
    return %c0_i32, %c0_i32_0 : i32, i32
  }
  func.func @transform_2(%arg0: i32) -> (i32, i32) {
    %c0_i32 = arith.constant 0 : i32
    %c0_i32_0 = arith.constant 0 : i32
    %c0_i32_1 = arith.constant 0 : i32
    return %c0_i32, %c0_i32_0 : i32, i32
  }
  func.func @transform_3(%arg0: i32) -> (i32, i32) {
    %c0_i32 = arith.constant 0 : i32
    %c0_i32_0 = arith.constant 0 : i32
    %c0_i32_1 = arith.constant 0 : i32
    return %c0_i32, %c0_i32_0 : i32, i32
  }
  func.func @transform_4(%arg0: i32) -> (i32, i32) {
    %c0_i32 = arith.constant 0 : i32
    %c0_i32_0 = arith.constant 0 : i32
    %c0_i32_1 = arith.constant 0 : i32
    return %c0_i32, %c0_i32_0 : i32, i32
  }
  func.func @transform_5(%arg0: i32) -> (i32, i32) {
    %c0_i32 = arith.constant 0 : i32
    %c0_i32_0 = arith.constant 0 : i32
    return %arg0, %c0_i32 : i32, i32
  }
}

</mosaic_0001>

<llo_original>
// kernel: tpu_custom_call.1
$region0: #{tpu_custom_call.1}
  #allocation0 [shape = 'u32[]', space=smem, size = 0x4, offset = 0x4, fixed_abs, tag = 'smem constant byte address 0x4 - core index']
  #allocation1 [shape = 'u32[144,128]{1,0:T(1,128)}', space=vmem, size = 0x12000, scoped, tag = 'internal scratch']
  %s0 = inlined_call_operand.vmem [shape: f32[8,64], index: 0, kind: input, shape index: {}]
  %s1 = inlined_call_operand.vmem [shape: f32[64,128], index: 1, kind: input, shape index: {}]
  %s2 = inlined_call_operand.vmem [shape: f32[1,128], index: 2, kind: input, shape index: {}]
  %s3 = inlined_call_operand.vmem [shape: f32[128,64], index: 3, kind: input, shape index: {}]
  %s4 = inlined_call_operand.vmem [shape: f32[1,64], index: 4, kind: input, shape index: {}]
  %s5 = inlined_call_operand.hbm [shape: f32[8,64], index: 5, kind: output, shape index: {}]
  %s6 = sld [smem:[#allocation0]]
  $region30: #{tpu_custom_call.1} parent=0
    _
  %s8 = ssub.s32 1, %s6
  %s9 = scalar_select 0, %s8, %s6
  $region1: #{tpu_custom_call.1} parent=0
    #allocation2 [shape = 'u8[4096]{0}', space=vmem, size = 0x1000, scoped, tag = 'output window, operand 0, single buffered']
    #allocation3 [shape = 's32[1]{0}', space=sflag, size = 0x4, scoped, tag = 'scoped memory for tpu_custom_call.1']
    %10 = vsyncpa [#allocation3], 0
    // Predicated region
    $region2: #{tpu_custom_call.1} parent=1 // pred_check
      _
    $region3: #{tpu_custom_call.1} parent=1 // pred_check_branch
      %12 = sbr.rel (0) target = $region5
    $region4: #{tpu_custom_call.1} parent=1 // pred_region
      _
    $region5: #{tpu_custom_call.1} parent=1 // pred_fallthru
      _
    // Predicated region
    $region6: #{tpu_custom_call.1} parent=1 // pred_check
      _
    $region7: #{tpu_custom_call.1} parent=1 // pred_check_branch
      %14 = sbr.rel (0) target = $region9
    $region8: #{tpu_custom_call.1} parent=1 // pred_region
      _
    $region9: #{tpu_custom_call.1} parent=1 // pred_fallthru
      _
    // Predicated region
    $region10: #{tpu_custom_call.1} parent=1 // pred_check
      _
    $region11: #{tpu_custom_call.1} parent=1 // pred_check_branch
      %16 = sbr.rel (0) target = $region13
    $region12: #{tpu_custom_call.1} parent=1 // pred_region
      _
    $region13: #{tpu_custom_call.1} parent=1 // pred_fallthru
      _
    // Predicated region
    $region14: #{tpu_custom_call.1} parent=1 // pred_check
      _
    $region15: #{tpu_custom_call.1} parent=1 // pred_check_branch
      %18 = sbr.rel (0) target = $region17
    $region16: #{tpu_custom_call.1} parent=1 // pred_region
      _
    $region17: #{tpu_custom_call.1} parent=1 // pred_fallthru
      _
    // Predicated region
    $region18: #{tpu_custom_call.1} parent=1 // pred_check
      _
    $region19: #{tpu_custom_call.1} parent=1 // pred_check_branch
      %20 = sbr.rel (0) target = $region21
    $region20: #{tpu_custom_call.1} parent=1 // pred_region
      _
    $region21: #{tpu_custom_call.1} parent=1 // pred_fallthru
      _
    %v21 = vld [vmem:[%s0] sm:$0xff]
    %v22 = vld [vmem:[%s1] sm:$0xff]
    %v23 = vld [vmem:[%s1 + $0x8] sm:$0xff]
    %v24 = vld [vmem:[%s1 + $0x10] sm:$0xff]
    %v25 = vld [vmem:[%s1 + $0x18] sm:$0xff]
    %v26 = vld [vmem:[%s1 + $0x20] sm:$0xff]
    %v27 = vld [vmem:[%s1 + $0x28] sm:$0xff]
    %v28 = vld [vmem:[%s1 + $0x30] sm:$0xff]
    %v29 = vld [vmem:[%s1 + $0x38] sm:$0xff]
    %v30 = vld [vmem:[%s2] sm:$0x1]
    %v32 = vlaneseq
    %v33 = vshrl.u32 %v32, 7
    %v34 = vsub.s32 0, %v33
    %v35 = vrot.slane %v30, %v34
    %vm37 = vcmask 523264
    %v39 = vsel %vm37, %v21, 0
    %41 = vmatprep.subr.mxu0 0.0
    %42 = vmatpush1.msra.mxu0 %v22
    %43 = vmatprep.subr.mxu0 0.0
    %44 = vmatpush1.msra.mxu0 %v23
    %45 = vmatprep.subr.mxu0 0.0
    %46 = vmatpush1.msra.mxu0 %v24
    %47 = vmatprep.subr.mxu0 0.0
    %48 = vmatpush1.msra.mxu0 %v25
    %49 = vmatprep.subr.mxu0 0.0
    %50 = vmatpush1.msra.mxu0 %v26
    %51 = vmatprep.subr.mxu0 0.0
    %52 = vmatpush1.msra.mxu0 %v27
    %53 = vmatprep.subr.mxu0 0.0
    %54 = vmatpush1.msra.mxu0 %v28
    %55 = vmatprep.subr.mxu0 0.0
    %56 = vmatpush1.msra.mxu0 %v29
    %57 = vmatprep.subr.mxu0 0.0
    %58 = vmatpush1.msra.mxu0 0.0
    %59 = vmatprep.subr.mxu0 0.0
    %60 = vmatpush1.msra.mxu0 0.0
    %61 = vmatprep.subr.mxu0 0.0
    %62 = vmatpush1.msra.mxu0 0.0
    %63 = vmatprep.subr.mxu0 0.0
    %64 = vmatpush1.msra.mxu0 0.0
    %65 = vmatprep.subr.mxu0 0.0
    %66 = vmatpush1.msra.mxu0 0.0
    %67 = vmatprep.subr.mxu0 0.0
    %68 = vmatpush1.msra.mxu0 0.0
    %69 = vmatprep.subr.mxu0 0.0
    %70 = vmatpush1.msra.mxu0 0.0
    %71 = vmatprep.subr.mxu0 0.0
    %72 = vmatpush1.msra.mxu0 0.0
    %73 = vmatprep.subr.mxu0 0.0
    %74 = vmatpush1.msra.mxu0 0.0
    %75 = vmatprep.subr.mxu0 0.0
    %76 = vmatpush1.msra.mxu0 0.0
    %77 = vmatprep.subr.mxu0 0.0
    %78 = vmatpush1.msra.mxu0 0.0
    %79 = vmatprep.subr.mxu0 0.0
    %80 = vmatpush1.msra.mxu0 0.0
    %81 = vmatprep.subr.mxu0 0.0
    %82 = vmatpush1.msra.mxu0 0.0
    %83 = vmatprep.subr.mxu0 0.0
    %84 = vmatpush1.msra.mxu0 0.0
    %85 = vmatprep.subr.mxu0 0.0
    %86 = vmatpush1.msra.mxu0 0.0
    %87 = vmatprep.subr.mxu0 0.0
    %88 = vmatpush1.msra.mxu0 0.0
    %89 = vmatprep.subr.mxu0 0.0
    %90 = vmatpush1.msra.mxu0 0.0
    %91 = vmatprep.subr.mxu0 0.0
    %92 = vmatpush1.msra.mxu0 0.0
    %93 = vmatprep.subr.mxu0 0.0
    %94 = vmatpush1.msra.mxu0 0.0
    %95 = vmatprep.subr.mxu0 0.0
    %96 = vmatpush1.msra.mxu0 0.0
    %97 = vmatprep.subr.mxu0 0.0
    %98 = vmatpush1.msra.mxu0 0.0
    %99 = vmatprep.subr.mxu0 0.0
    %100 = vmatpush1.msra.mxu0 0.0
    %101 = vmatprep.subr.mxu0 0.0
    %102 = vmatpush1.msra.mxu0 0.0
    %103 = vmatprep.subr.mxu0 0.0
    %104 = vmatpush1.msra.mxu0 0.0
    %105 = vmatprep.mubr.f32.mxu0 0.0
    %106 = vmatmul.mubr.f32.gmra.mrb[0].mxu0 %v39
    %v107 = vpop.f32.mrb[0].mxu0
    %v108 = vadd.f32 %v35, %v107
    %v109 = vpop.f32.mrb[0].mxu0
    %110 = vdwg.mxu0
    %v111 = vmax.f32 %v108, 0.0
    %v112 = vld [vmem:[%s3] sm:$0xff]
    %v113 = vld [vmem:[%s3 + $0x8] sm:$0xff]
    %v114 = vld [vmem:[%s3 + $0x10] sm:$0xff]
    %v115 = vld [vmem:[%s3 + $0x18] sm:$0xff]
    %v116 = vld [vmem:[%s3 + $0x20] sm:$0xff]
    %v117 = vld [vmem:[%s3 + $0x28] sm:$0xff]
    %v118 = vld [vmem:[%s3 + $0x30] sm:$0xff]
    %v119 = vld [vmem:[%s3 + $0x38] sm:$0xff]
    %v120 = vld [vmem:[%s3 + $0x40] sm:$0xff]
    %v121 = vld [vmem:[%s3 + $0x48] sm:$0xff]
    %v122 = vld [vmem:[%s3 + $0x50] sm:$0xff]
    %v123 = vld [vmem:[%s3 + $0x58] sm:$0xff]
    %v124 = vld [vmem:[%s3 + $0x60] sm:$0xff]
    %v125 = vld [vmem:[%s3 + $0x68] sm:$0xff]
    %v126 = vld [vmem:[%s3 + $0x70] sm:$0xff]
    %v127 = vld [vmem:[%s3 + $0x78] sm:$0xff]
    %v128 = vld [vmem:[%s4] sm:$0x1]
    %v130 = vlaneseq
    %v131 = vshrl.u32 %v130, 7
    %v132 = vsub.s32 0, %v131
    %v133 = vrot.slane %v128, %v132
    %135 = vmatprep.subr.mxu0 0.0
    %136 = vmatpush1.msra.mxu0 %v112
    %137 = vmatprep.subr.mxu0 0.0
    %138 = vmatpush1.msra.mxu0 %v113
    %139 = vmatprep.subr.mxu0 0.0
    %140 = vmatpush1.msra.mxu0 %v114
    %141 = vmatprep.subr.mxu0 0.0
    %142 = vmatpush1.msra.mxu0 %v115
    %143 = vmatprep.subr.mxu0 0.0
    %144 = vmatpush1.msra.mxu0 %v116
    %145 = vmatprep.subr.mxu0 0.0
    %146 = vmatpush1.msra.mxu0 %v117
    %147 = vmatprep.subr.mxu0 0.0
    %148 = vmatpush1.msra.mxu0 %v118
    %149 = vmatprep.subr.mxu0 0.0
    %150 = vmatpush1.msra.mxu0 %v119
    %151 = vmatprep.subr.mxu0 0.0
    %152 = vmatpush1.msra.mxu0 %v120
    %153 = vmatprep.subr.mxu0 0.0
    %154 = vmatpush1.msra.mxu0 %v121
    %155 = vmatprep.subr.mxu0 0.0
    %156 = vmatpush1.msra.mxu0 %v122
    %157 = vmatprep.subr.mxu0 0.0
    %158 = vmatpush1.msra.mxu0 %v123
    %159 = vmatprep.subr.mxu0 0.0
    %160 = vmatpush1.msra.mxu0 %v124
    %161 = vmatprep.subr.mxu0 0.0
    %162 = vmatpush1.msra.mxu0 %v125
    %163 = vmatprep.subr.mxu0 0.0
    %164 = vmatpush1.msra.mxu0 %v126
    %165 = vmatprep.subr.mxu0 0.0
    %166 = vmatpush1.msra.mxu0 %v127
    %167 = vmatprep.subr.mxu0 0.0
    %168 = vmatpush1.msra.mxu0 0.0
    %169 = vmatprep.subr.mxu0 0.0
    %170 = vmatpush1.msra.mxu0 0.0
    %171 = vmatprep.subr.mxu0 0.0
    %172 = vmatpush1.msra.mxu0 0.0
    %173 = vmatprep.subr.mxu0 0.0
    %174 = vmatpush1.msra.mxu0 0.0
    %175 = vmatprep.subr.mxu0 0.0
    %176 = vmatpush1.msra.mxu0 0.0
    %177 = vmatprep.subr.mxu0 0.0
    %178 = vmatpush1.msra.mxu0 0.0
    %179 = vmatprep.subr.mxu0 0.0
    %180 = vmatpush1.msra.mxu0 0.0
    %181 = vmatprep.subr.mxu0 0.0
    %182 = vmatpush1.msra.mxu0 0.0
    %183 = vmatprep.subr.mxu0 0.0
    %184 = vmatpush1.msra.mxu0 0.0
    %185 = vmatprep.subr.mxu0 0.0
    %186 = vmatpush1.msra.mxu0 0.0
    %187 = vmatprep.subr.mxu0 0.0
    %188 = vmatpush1.msra.mxu0 0.0
    %189 = vmatprep.subr.mxu0 0.0
    %190 = vmatpush1.msra.mxu0 0.0
    %191 = vmatprep.subr.mxu0 0.0
    %192 = vmatpush1.msra.mxu0 0.0
    %193 = vmatprep.subr.mxu0 0.0
    %194 = vmatpush1.msra.mxu0 0.0
    %195 = vmatprep.subr.mxu0 0.0
    %196 = vmatpush1.msra.mxu0 0.0
    %197 = vmatprep.subr.mxu0 0.0
    %198 = vmatpush1.msra.mxu0 0.0
    %199 = vmatprep.mubr.f32.mxu0 0.0
    %200 = vmatmul.mubr.f32.gmra.mrb[0].mxu0 %v111
    %v201 = vpop.f32.mrb[0].mxu0
    %v202 = vadd.f32 %v133, %v201
    %v203 = vpop.f32.mrb[0].mxu0
    %204 = vdwg.mxu0
    %v205 = vxor.u32 %v202, 2147483648
    %v206 = vmul.f32 %v205, 1.442695
    %v207 = vpow.pop %v206
    %v208 = vadd.f32 %v207, 1.0
    %v209 = vrcp.pop %v208
    %v210 = vmul.f32 1.0, %v209
    %211 = vst.msk [vmem:[#allocation2] sm:$0xff] %vm37, %v210
    // Predicated region
    $region22: #{tpu_custom_call.1} parent=1 // pred_check
      _
    $region23: #{tpu_custom_call.1} parent=1 // pred_check_branch
      %213 = sbr.rel (0) target = $region25
    $region24: #{tpu_custom_call.1} parent=1 // pred_region
      %s215 = ssub.s32 128, 128
      %216 = vsyncadd [#allocation3], %s215
      %s218 = sshll.u32 [#allocation2], 4
      %s219 = int_to_ptr.vmem [resolvable:$true] %s218
      %221 = dma.vmem_to_hbm [thread:$0]  %s219, 128, %s5, [#allocation3]
    $region25: #{tpu_custom_call.1} parent=1 // pred_fallthru
      _
    // Predicated region
    $region26: #{tpu_custom_call.1} parent=1 // pred_check
      _
    $region27: #{tpu_custom_call.1} parent=1 // pred_check_branch
      %223 = sbr.rel (0) target = $region29
    $region28: #{tpu_custom_call.1} parent=1 // pred_region
      %224 = dma.done [#allocation3], 128
    $region29: #{tpu_custom_call.1} parent=1 // pred_fallthru
      _
    %225 = vsyncpa [#allocation3], 1

</llo_original>
